<compile_context>
chip_gen: v5e
topology: v5e:2x2
jax: 0.10.0
libtpu: 0.0.40
codegen_flags: <defaults>
</compile_context>

<pallas_src>
import math

import jax
import jax.numpy as jnp
from jax.experimental import pallas as pl
from jax.experimental.pallas import tpu as pltpu


def build_positional_encoding(d_model: int, max_len: int = 5000,
                              dtype=jnp.float32) -> jnp.ndarray:
    """Builds the (max_len, 1, d_model) PE buffer (mirrors the PyTorch __init__).

    Build once at model init, in the dtype the model runs in, and keep it
    device-resident; the forward pass never re-slices or re-casts it.
    """
    position = jnp.arange(0, max_len, dtype=jnp.float32)[:, None]          # (L, 1)
    div_term = jnp.exp(
        jnp.arange(0, d_model, 2, dtype=jnp.float32)
        * (-math.log(10000.0) / d_model))                                   # (E/2,)
    pe = jnp.zeros((max_len, d_model), dtype=jnp.float32)
    pe = pe.at[:, 0::2].set(jnp.sin(position * div_term))
    pe = pe.at[:, 1::2].set(jnp.cos(position * div_term))
    return pe[:, None, :].astype(dtype)                                      # (L, 1, E)


def _pe_add_kernel(x_ref, pe_ref, o_ref):
    # x_ref: (tS, N, E), pe_ref: (tS, 1, E) -> native sublane broadcast over N.
    o_ref[...] = x_ref[...] + pe_ref[...]


def _padded_block_bytes(ts: int, second: int, minor: int, itemsize: int) -> int:
    """Rough VMEM footprint of a (ts, second, minor) tile (sublane/lane padding)."""
    return ts * (-(-second // 8) * 8) * (-(-minor // 128) * 128) * itemsize


def _choose_seq_tile(S: int, N: int, E: int, itemsize: int,
                     target_block_bytes: int = 2 << 20) -> int:
    """Pick the sequence-tile size tS.

    Targets ~2 MiB of x per grid step (amortizes the ~0.35 us/step grid
    overhead and keeps the DMA pipeline near the HBM roofline), keeps at least
    2 grid steps when S >= 2 (pipeline overlap; lets v7x shard the 'parallel'
    axis over its two TensorCores), and prefers a tile that divides S so the
    last block is not ragged.
    """
    bytes_per_row = max(1, N * E * itemsize)
    ts = max(1, target_block_bytes // bytes_per_row)
    ts = min(ts, S)
    if S >= 2:
        ts = min(ts, -(-S // 2))          # ceil(S/2): at least two grid steps
    # Prefer a divisor of S close to the target (no ragged tail block).
    for cand in range(ts, max(1, ts - 64) - 1, -1):
        if S % cand == 0:
            return cand
    # No nearby divisor: accept a ragged tail.  Pallas pads out-of-range reads
    # of the last x block and masks its out-of-range output writes, and the pe
    # rows it touches are still inside the max_len buffer, so this is safe.
    return ts


def positional_encoding_forward(x: jnp.ndarray, pe: jnp.ndarray, *,
                                donate_x: bool = False,
                                target_block_bytes: int = 2 << 20,
                                min_pallas_bytes: int = 64 << 10) -> jnp.ndarray:
    """y = x + pe[:S], broadcast over the batch axis.

    x : (S, N, E);  pe : (max_len, 1, E) with max_len >= S.
    """
    S, N, E = x.shape
    max_len = pe.shape[0]
    if pe.shape != (max_len, 1, E):
        raise ValueError(f"pe must have shape (max_len, 1, {E}); got {pe.shape}")
    if max_len < S:
        raise ValueError(f"sequence length {S} exceeds pe max_len {max_len}")
    if pe.dtype != x.dtype:
        # Prefer building pe in the model dtype at init; this cast is a fallback.
        pe = pe.astype(x.dtype)

    itemsize = jnp.dtype(x.dtype).itemsize
    if S * N * E * itemsize < min_pallas_bytes:
        # Tiny op: kernel launch + unpipelined DMA dwarf the add itself; let
        # XLA fuse it into the neighbouring embedding-scale / dropout ops.
        return x + pe[:S]

    tS = _choose_seq_tile(S, N, E, itemsize, target_block_bytes)
    grid = (pl.cdiv(S, tS),)

    # Double-buffered in/out x tiles + pe tile, with headroom; explicit so the
    # same tiling stays inside scoped VMEM on v5e (16 MiB default) and within
    # v7x's 64 MiB physical VMEM.
    per_step = (2 * _padded_block_bytes(tS, N, E, itemsize)
                + _padded_block_bytes(tS, 1, E, itemsize))
    vmem_limit = int(min(48 << 20, max(16 << 20, 3 * per_step)))

    return pl.pallas_call(
        _pe_add_kernel,
        out_shape=jax.ShapeDtypeStruct((S, N, E), x.dtype),
        grid_spec=pltpu.PrefetchScalarGridSpec(
            num_scalar_prefetch=0,
            grid=grid,
            in_specs=[
                # x: last two block dims equal the full (N, E) extents, so the
                # (8, 128) tiling constraint is satisfied for any N, E.
                pl.BlockSpec((tS, N, E), lambda i: (i, 0, 0)),
                # pe: full buffer passed; block indexing restricts reads to the
                # first ~S rows for free (no wrapper-side pe[:S] copy per call).
                pl.BlockSpec((tS, 1, E), lambda i: (i, 0, 0)),
            ],
            out_specs=pl.BlockSpec((tS, N, E), lambda i: (i, 0, 0)),
        ),
        compiler_params=pltpu.CompilerParams(
            dimension_semantics=("parallel",),
            vmem_limit_bytes=vmem_limit,
        ),
        # Optional in-place add: removes the separate HBM output allocation
        # when the caller donates x (e.g. jax.jit(..., donate_argnums=...)).
        input_output_aliases=({0: 0} if donate_x else {}),
    )(x, pe)


if __name__ == "__main__":
    key = jax.random.PRNGKey(0)
    k_main, k_tiny = jax.random.split(key)

    # Small but lane/sublane-dense config: d_model multiple of 128, batch a
    # multiple of 8, sequence long enough for a multi-step grid (grid=(2,)).
    S, N, E = 256, 8, 128
    max_len = 512

    pe_f32 = build_positional_encoding(E, max_len=max_len, dtype=jnp.float32)
    x = jax.random.normal(k_main, (S, N, E), dtype=jnp.float32)

    out = jax.block_until_ready(positional_encoding_forward(x, pe_f32))
    ref = x + pe_f32[:S]
    assert out.shape == (S, N, E) and out.dtype == jnp.float32
    assert jnp.allclose(out, ref, atol=1e-6), "f32 Pallas path mismatch"

    # bf16 path: halves HBM traffic for this bandwidth-bound op.
    pe_bf16 = build_positional_encoding(E, max_len=max_len, dtype=jnp.bfloat16)
    x_bf16 = x.astype(jnp.bfloat16)
    out_bf16 = jax.block_until_ready(positional_encoding_forward(x_bf16, pe_bf16))
    assert out_bf16.dtype == jnp.bfloat16
    assert jnp.allclose(out_bf16.astype(jnp.float32), ref, atol=5e-2, rtol=5e-2), \
        "bf16 Pallas path mismatch"

    # Tiny problem (2 KiB): takes the fused-XLA fallback path by design.
    s2, n2, e2 = 8, 2, 32
    pe_small = build_positional_encoding(e2, max_len=64, dtype=jnp.float32)
    x_small = jax.random.normal(k_tiny, (s2, n2, e2), dtype=jnp.float32)
    out_small = jax.block_until_ready(positional_encoding_forward(x_small, pe_small))
    assert jnp.allclose(out_small, x_small + pe_small[:s2], atol=1e-6), \
        "tiny-shape fallback mismatch"

    print("KERNEL_OK")
</pallas_src>

<mosaic_0001>
module attributes {stable_mosaic.version = 11 : i64} {
  func.func @_pe_add_kernel(%arg0: i32, %arg1: memref<128x8x128xf32, #tpu.memory_space<vmem>>, %arg2: memref<128x1x128xf32, #tpu.memory_space<vmem>>, %arg3: memref<128x8x128xf32, #tpu.memory_space<vmem>>) attributes {dimension_semantics = [#tpu.dimension_semantics<parallel>], iteration_bounds = array<i64: 2>, scalar_prefetch = 0 : i64, scratch_operands = 0 : i64, tpu.core_type = #tpu.core_type<tc>, window_params = [{transform_indices = @transform_0, window_bounds = array<i64: 128, 8, 128>}, {transform_indices = @transform_1, window_bounds = array<i64: 128, 1, 128>}, {transform_indices = @transform_2, window_bounds = array<i64: 128, 8, 128>}]} {
    %c0 = arith.constant 0 : index
    %c0_0 = arith.constant 0 : index
    %c0_1 = arith.constant 0 : index
    %0 = vector.load %arg1[%c0, %c0_0, %c0_1] : memref<128x8x128xf32, #tpu.memory_space<vmem>>, vector<128x8x128xf32>
    %c0_2 = arith.constant 0 : index
    %c0_3 = arith.constant 0 : index
    %c0_4 = arith.constant 0 : index
    %1 = vector.load %arg2[%c0_2, %c0_3, %c0_4] : memref<128x1x128xf32, #tpu.memory_space<vmem>>, vector<128x1x128xf32>
    %2 = vector.broadcast %1 : vector<128x1x128xf32> to vector<128x8x128xf32>
    %3 = arith.addf %0, %2 : vector<128x8x128xf32>
    %c0_5 = arith.constant 0 : index
    %c0_6 = arith.constant 0 : index
    %c0_7 = arith.constant 0 : index
    %4 = vector.load %arg3[%c0_5, %c0_6, %c0_7] : memref<128x8x128xf32, #tpu.memory_space<vmem>>, vector<128x8x128xf32>
    tpu.vector_store %arg3[%c0_5, %c0_6, %c0_7], %3 {strides = array<i32>} : memref<128x8x128xf32, #tpu.memory_space<vmem>>, vector<128x8x128xf32>,
    return
  }
  func.func @transform_0(%arg0: i32) -> (i32, i32, i32) {
    %c0_i32 = arith.constant 0 : i32
    %c0_i32_0 = arith.constant 0 : i32
    %c0_i32_1 = arith.constant 0 : i32
    return %arg0, %c0_i32, %c0_i32_0 : i32, i32, i32
  }
  func.func @transform_1(%arg0: i32) -> (i32, i32, i32) {
    %c0_i32 = arith.constant 0 : i32
    %c0_i32_0 = arith.constant 0 : i32
    %c0_i32_1 = arith.constant 0 : i32
    return %arg0, %c0_i32, %c0_i32_0 : i32, i32, i32
  }
  func.func @transform_2(%arg0: i32) -> (i32, i32, i32) {
    %c0_i32 = arith.constant 0 : i32
    %c0_i32_0 = arith.constant 0 : i32
    %c0_i32_1 = arith.constant 0 : i32
    return %arg0, %c0_i32, %c0_i32_0 : i32, i32, i32
  }
}

</mosaic_0001>

<llo_original>
// kernel: tpu_custom_call.1
$region0: #{tpu_custom_call.1}
  #allocation0 [shape = 'u32[]', space=smem, size = 0x4, offset = 0x4, fixed_abs, tag = 'smem constant byte address 0x4 - core index']
  #allocation1 [shape = 'u32[72,128]{1,0:T(1,128)}', space=vmem, size = 0x9000, scoped, tag = 'internal scratch']
  %s0 = inlined_call_operand.hbm [shape: f32[256,8,128], index: 0, kind: input, shape index: {}]
  %s1 = inlined_call_operand.hbm [shape: f32[512,1,128], index: 1, kind: input, shape index: {}]
  %s2 = inlined_call_operand.hbm [shape: f32[256,8,128], index: 2, kind: output, shape index: {}]
  %s3 = sld [smem:[#allocation0]]
  $region49: #{tpu_custom_call.1} parent=0
    _
  %s5 = ssub.s32 1, %s3
  %s6 = scalar_select 0, %s5, %s3
  $region1: #{tpu_custom_call.1} parent=0
    #allocation2 [shape = 'u8[1048576]{0}', space=vmem, size = 0x100000, scoped, tag = 'input window, operand 0']
    #allocation3 [shape = 's32[2]{0}', space=sflag, size = 0x8, scoped, tag = 'scoped memory for tpu_custom_call.1']
    #allocation4 [shape = 's32[2]{0}', space=sflag, size = 0x8, scoped, tag = 'scoped memory for tpu_custom_call.1']
    #allocation5 [shape = 'u8[131072]{0}', space=vmem, size = 0x20000, scoped, tag = 'input window, operand 1']
    #allocation6 [shape = 's32[2]{0}', space=sflag, size = 0x8, scoped, tag = 'scoped memory for tpu_custom_call.1']
    #allocation7 [shape = 'u8[1048576]{0}', space=vmem, size = 0x100000, scoped, tag = 'output window, operand 0']
    %7 = vsyncpa [#allocation3], 0
    %s8 = scalar_lea.sflag [#allocation3], 1
    %9 = vsyncpa %s8, 0
    %10 = vsyncpa [#allocation6], 0
    %s11 = scalar_lea.sflag [#allocation6], 1
    %12 = vsyncpa %s11, 0
    %13 = vsyncpa [#allocation4], 0
    %s14 = scalar_lea.sflag [#allocation4], 1
    %15 = vsyncpa %s14, 0
    loop: start=0, step=1, limit=4
    $region2: #{tpu_custom_call.1} parent=1 // loop_pre_header
      _
    $region3: #{tpu_custom_call.1} parent=1 // loop_header
      %s17 = sphi 0, %s21
      %p18 = scmp.ge.s32.totalorder %s17, 4
      %s27 = sphi 0, %s29
      %s30 = sphi 0, %s27
      %s31 = sphi 0, %s30
      %s47 = sphi 0, %s31
      %s53 = sphi 0, %s55
      %s56 = sphi 0, %s53
      %s57 = sphi 0, %s56
      %s73 = sphi 0, %s57
      %s79 = sphi 0, %s81
      %s82 = sphi 0, %s79
      %s83 = sphi 0, %s82
      %s99 = sphi 0, %s83
    $region4: #{tpu_custom_call.1} parent=1 // loop_header_branch
      %20 = sbr.rel (%p18) target = $region8
    $region5: #{tpu_custom_call.1} parent=1 // loop_body
      %s22 = ssub.s32 %s17, 1
      %s23 = ssub.s32 %s17, 2
      %s24 = sadd.s32 %s17, 1
      %s25 = ssub.s32 %s17, %s24
      %p26 = scmp.eq.s32.totalorder %s25, 0
      %s28 = sadd.s32 %s27, 1
      %s29 = scalar_select %p26, %s27, %s28
      %p32 = pneg %p26
      %p33 = scmp.eq.s32.totalorder %s17, 1
      %p34 = por %p32, %p33
      %p35 = scmp.ne.s32.totalorder %s27, %s30
      %p36 = scmp.eq.s32.totalorder %s17, 0
      %p37 = por %p35, %p36
      %p38 = scmp.ne.s32.totalorder %s27, %s30
      %p39 = scmp.eq.s32.totalorder %s22, 1
      %p40 = por %p38, %p39
      %p41 = scmp.ne.s32.totalorder %s30, %s31
      %p42 = scmp.eq.s32.totalorder %s22, 0
      %p43 = por %p41, %p42
      %p44 = scmp.ne.s32.totalorder %s30, %s31
      %p45 = scmp.eq.s32.totalorder %s23, 1
      %p46 = por %p44, %p45
      %p48 = scmp.ne.s32.totalorder %s31, %s47
      %p49 = scmp.eq.s32.totalorder %s23, 0
      %p50 = por %p48, %p49
      %s51 = ssub.s32 %s17, %s24
      %p52 = scmp.eq.s32.totalorder %s51, 0
      %s54 = sadd.s32 %s53, 1
      %s55 = scalar_select %p52, %s53, %s54
      %p58 = pneg %p52
      %p59 = scmp.eq.s32.totalorder %s17, 1
      %p60 = por %p58, %p59
      %p61 = scmp.ne.s32.totalorder %s53, %s56
      %p62 = scmp.eq.s32.totalorder %s17, 0
      %p63 = por %p61, %p62
      %p64 = scmp.ne.s32.totalorder %s53, %s56
      %p65 = scmp.eq.s32.totalorder %s22, 1
      %p66 = por %p64, %p65
      %p67 = scmp.ne.s32.totalorder %s56, %s57
      %p68 = scmp.eq.s32.totalorder %s22, 0
      %p69 = por %p67, %p68
      %p70 = scmp.ne.s32.totalorder %s56, %s57
      %p71 = scmp.eq.s32.totalorder %s23, 1
      %p72 = por %p70, %p71
      %p74 = scmp.ne.s32.totalorder %s57, %s73
      %p75 = scmp.eq.s32.totalorder %s23, 0
      %p76 = por %p74, %p75
      %s77 = ssub.s32 %s17, %s24
      %p78 = scmp.eq.s32.totalorder %s77, 0
      %s80 = sadd.s32 %s79, 1
      %s81 = scalar_select %p78, %s79, %s80
      %p84 = pneg %p78
      %p85 = scmp.eq.s32.totalorder %s17, 1
      %p86 = por %p84, %p85
      %p87 = scmp.ne.s32.totalorder %s79, %s82
      %p88 = scmp.eq.s32.totalorder %s17, 0
      %p89 = por %p87, %p88
      %p90 = scmp.ne.s32.totalorder %s79, %s82
      %p91 = scmp.eq.s32.totalorder %s22, 1
      %p92 = por %p90, %p91
      %p93 = scmp.ne.s32.totalorder %s82, %s83
      %p94 = scmp.eq.s32.totalorder %s22, 0
      %p95 = por %p93, %p94
      %p96 = scmp.ne.s32.totalorder %s82, %s83
      %p97 = scmp.eq.s32.totalorder %s23, 1
      %p98 = por %p96, %p97
      %p100 = scmp.ne.s32.totalorder %s83, %s99
      %p101 = scmp.eq.s32.totalorder %s23, 0
      %p102 = por %p100, %p101
      %p103 = scmp.le.s32.totalorder 1, %s17
      %p104 = scmp.lt.s32.totalorder %s17, 3
      %p105 = pnand %p103, %p104
      %p106 = pneg %p105
      // Predicated region
      $region9: #{tpu_custom_call.1} parent=5 // pred_check
        _
      $region10: #{tpu_custom_call.1} parent=5 // pred_check_branch
        %108 = sbr.rel (%p105) target = $region12
      $region11: #{tpu_custom_call.1} parent=5 // pred_region
        %s109 = ssub.s32 %s17, 1
      $region12: #{tpu_custom_call.1} parent=5 // pred_fallthru
        _
      %p110 = scmp.lt.s32.totalorder %s17, 2
      // Predicated region
      $region13: #{tpu_custom_call.1} parent=5 // pred_check
        %p111 = pneg %p110
      $region14: #{tpu_custom_call.1} parent=5 // pred_check_branch
        %113 = sbr.rel (%p111) target = $region16
      $region15: #{tpu_custom_call.1} parent=5 // pred_region
        // Predicated region
        $region17: #{tpu_custom_call.1} parent=15 // pred_check
          %p114 = pneg %p37
        $region18: #{tpu_custom_call.1} parent=15 // pred_check_branch
          %116 = sbr.rel (%p114) target = $region20
        $region19: #{tpu_custom_call.1} parent=15 // pred_region
          %s117 = sand.u32 %s27, 1
          %s118 = scalar_lea.sflag [#allocation3], %s117
          %s119 = sand.u32 %s27, 1
          %s120 = smul.addr %s119, 1024
          %s121 = scalar_lea.vmem [#allocation2], %s120
          %s122 = smul.u32 128, %s17
          %124 = vsyncadd %s118, 0
          %s125 = smul.addr %s122, 8
          %s126 = scalar_lea.hbm %s0, %s125
          %s127 = sshll.u32 %s126, 4
          %s128 = int_to_ptr.hbm [resolvable:$true] %s127
          %s129 = sshll.u32 %s121, 4
          %s130 = int_to_ptr.vmem [resolvable:$true] %s129
          %135 = dma.hbm_to_vmem [thread:$0]  %s128, 16384, %s130, %s118, 128, 128, 8
        $region20: #{tpu_custom_call.1} parent=15 // pred_fallthru
          _
        // Predicated region
        $region21: #{tpu_custom_call.1} parent=15 // pred_check
          %p136 = pneg %p63
        $region22: #{tpu_custom_call.1} parent=15 // pred_check_branch
          %138 = sbr.rel (%p136) target = $region24
        $region23: #{tpu_custom_call.1} parent=15 // pred_region
          %s139 = sand.u32 %s53, 1
          %s140 = scalar_lea.sflag [#allocation6], %s139
          %s141 = sand.u32 %s53, 1
          %s142 = smul.addr %s141, 128
          %s143 = scalar_lea.vmem [#allocation5], %s142
          %s144 = smul.u32 128, %s17
          %146 = vsyncadd %s140, 0
          %s147 = scalar_lea.hbm %s1, %s144
          %s148 = sshll.u32 %s147, 4
          %s149 = int_to_ptr.hbm [resolvable:$true] %s148
          %s150 = sshll.u32 %s143, 4
          %s151 = int_to_ptr.vmem [resolvable:$true] %s150
          %156 = dma.hbm_to_vmem [thread:$0]  %s149, 2048, %s151, %s140, 16, 16, 1
        $region24: #{tpu_custom_call.1} parent=15 // pred_fallthru
          _
      $region16: #{tpu_custom_call.1} parent=5 // pred_fallthru
        _
      %p157 = scmp.le.s32.totalorder 1, %s17
      %p158 = scmp.lt.s32.totalorder %s17, 3
      %p159 = pnand %p157, %p158
      %p160 = pneg %p159
      // Predicated region
      $region25: #{tpu_custom_call.1} parent=5 // pred_check
        _
      $region26: #{tpu_custom_call.1} parent=5 // pred_check_branch
        %162 = sbr.rel (%p159) target = $region28
      $region27: #{tpu_custom_call.1} parent=5 // pred_region
        %s163 = ssub.s32 %s17, 1
        %s164 = sand.u32 %s30, 1
        %s165 = scalar_lea.sflag [#allocation3], %s164
        %s166 = sand.u32 %s30, 1
        %s167 = smul.addr %s166, 1024
        %s168 = scalar_lea.vmem [#allocation2], %s167
        // Predicated region
        $region29: #{tpu_custom_call.1} parent=27 // pred_check
          %p169 = pneg %p43
        $region30: #{tpu_custom_call.1} parent=27 // pred_check_branch
          %171 = sbr.rel (%p169) target = $region32
        $region31: #{tpu_custom_call.1} parent=27 // pred_region
          %173 = dma.done %s165, 16384
        $region32: #{tpu_custom_call.1} parent=27 // pred_fallthru
          _
        %s174 = sand.u32 %s56, 1
        %s175 = scalar_lea.sflag [#allocation6], %s174
        %s176 = sand.u32 %s56, 1
        %s177 = smul.addr %s176, 128
        %s178 = scalar_lea.vmem [#allocation5], %s177
        // Predicated region
        $region33: #{tpu_custom_call.1} parent=27 // pred_check
          %p179 = pneg %p69
        $region34: #{tpu_custom_call.1} parent=27 // pred_check_branch
          %181 = sbr.rel (%p179) target = $region36
        $region35: #{tpu_custom_call.1} parent=27 // pred_region
          %183 = dma.done %s175, 2048
        $region36: #{tpu_custom_call.1} parent=27 // pred_fallthru
          _
        %s184 = sand.u32 %s30, 1
        %s185 = scalar_lea.sflag [#allocation3], %s184
        %s186 = sand.u32 %s30, 1
        %s187 = smul.addr %s186, 1024
        %s188 = scalar_lea.vmem [#allocation2], %s187
        %p189 = pneg %p43
        %p190 = pneg %p40
        %s191 = sand.u32 %s56, 1
        %s192 = scalar_lea.sflag [#allocation6], %s191
        %s193 = sand.u32 %s56, 1
        %s194 = smul.addr %s193, 128
        %s195 = scalar_lea.vmem [#allocation5], %s194
        %p196 = pneg %p69
        %p197 = pneg %p66
        %p198 = pneg %p95
        %p199 = pneg %p92
        %s200 = sand.u32 %s82, 1
        %s201 = scalar_lea.sflag [#allocation4], %s200
        %s202 = sand.u32 %s82, 1
        %s203 = smul.addr %s202, 1024
        %s204 = scalar_lea.vmem [#allocation7], %s203
        %s205 = smul.u32 128, %s22
        %s206 = smul.u32 128, %s22
        %s207 = smul.u32 128, %s22
        %v208 = vld [vmem:[%s168] sm:$0xff]
        %v209 = vld [vmem:[%s168 + $0x8] sm:$0xff]
        %v210 = vld [vmem:[%s168 + $0x10] sm:$0xff]
        %v211 = vld [vmem:[%s168 + $0x18] sm:$0xff]
        %v212 = vld [vmem:[%s168 + $0x20] sm:$0xff]
        %v213 = vld [vmem:[%s168 + $0x28] sm:$0xff]
        %v214 = vld [vmem:[%s168 + $0x30] sm:$0xff]
        %v215 = vld [vmem:[%s168 + $0x38] sm:$0xff]
        %v216 = vld [vmem:[%s168 + $0x40] sm:$0xff]
        %v217 = vld [vmem:[%s168 + $0x48] sm:$0xff]
        %v218 = vld [vmem:[%s168 + $0x50] sm:$0xff]
        %v219 = vld [vmem:[%s168 + $0x58] sm:$0xff]
        %v220 = vld [vmem:[%s168 + $0x60] sm:$0xff]
        %v221 = vld [vmem:[%s168 + $0x68] sm:$0xff]
        %v222 = vld [vmem:[%s168 + $0x70] sm:$0xff]
        %v223 = vld [vmem:[%s168 + $0x78] sm:$0xff]
        %v224 = vld [vmem:[%s168 + $0x80] sm:$0xff]
        %v225 = vld [vmem:[%s168 + $0x88] sm:$0xff]
        %v226 = vld [vmem:[%s168 + $0x90] sm:$0xff]
        %v227 = vld [vmem:[%s168 + $0x98] sm:$0xff]
        %v228 = vld [vmem:[%s168 + $0xa0] sm:$0xff]
        %v229 = vld [vmem:[%s168 + $0xa8] sm:$0xff]
        %v230 = vld [vmem:[%s168 + $0xb0] sm:$0xff]
        %v231 = vld [vmem:[%s168 + $0xb8] sm:$0xff]
        %v232 = vld [vmem:[%s168 + $0xc0] sm:$0xff]
        %v233 = vld [vmem:[%s168 + $0xc8] sm:$0xff]
        %v234 = vld [vmem:[%s168 + $0xd0] sm:$0xff]
        %v235 = vld [vmem:[%s168 + $0xd8] sm:$0xff]
        %v236 = vld [vmem:[%s168 + $0xe0] sm:$0xff]
        %v237 = vld [vmem:[%s168 + $0xe8] sm:$0xff]
        %v238 = vld [vmem:[%s168 + $0xf0] sm:$0xff]
        %v239 = vld [vmem:[%s168 + $0xf8] sm:$0xff]
        %v240 = vld [vmem:[%s168 + $0x100] sm:$0xff]
        %v241 = vld [vmem:[%s168 + $0x108] sm:$0xff]
        %v242 = vld [vmem:[%s168 + $0x110] sm:$0xff]
        %v243 = vld [vmem:[%s168 + $0x118] sm:$0xff]
        %v244 = vld [vmem:[%s168 + $0x120] sm:$0xff]
        %v245 = vld [vmem:[%s168 + $0x128] sm:$0xff]
        %v246 = vld [vmem:[%s168 + $0x130] sm:$0xff]
        %v247 = vld [vmem:[%s168 + $0x138] sm:$0xff]
        %v248 = vld [vmem:[%s168 + $0x140] sm:$0xff]
        %v249 = vld [vmem:[%s168 + $0x148] sm:$0xff]
        %v250 = vld [vmem:[%s168 + $0x150] sm:$0xff]
        %v251 = vld [vmem:[%s168 + $0x158] sm:$0xff]
        %v252 = vld [vmem:[%s168 + $0x160] sm:$0xff]
        %v253 = vld [vmem:[%s168 + $0x168] sm:$0xff]
        %v254 = vld [vmem:[%s168 + $0x170] sm:$0xff]
        %v255 = vld [vmem:[%s168 + $0x178] sm:$0xff]
        %v256 = vld [vmem:[%s168 + $0x180] sm:$0xff]
        %v257 = vld [vmem:[%s168 + $0x188] sm:$0xff]
        %v258 = vld [vmem:[%s168 + $0x190] sm:$0xff]
        %v259 = vld [vmem:[%s168 + $0x198] sm:$0xff]
        %v260 = vld [vmem:[%s168 + $0x1a0] sm:$0xff]
        %v261 = vld [vmem:[%s168 + $0x1a8] sm:$0xff]
        %v262 = vld [vmem:[%s168 + $0x1b0] sm:$0xff]
        %v263 = vld [vmem:[%s168 + $0x1b8] sm:$0xff]
        %v264 = vld [vmem:[%s168 + $0x1c0] sm:$0xff]
        %v265 = vld [vmem:[%s168 + $0x1c8] sm:$0xff]
        %v266 = vld [vmem:[%s168 + $0x1d0] sm:$0xff]
        %v267 = vld [vmem:[%s168 + $0x1d8] sm:$0xff]
        %v268 = vld [vmem:[%s168 + $0x1e0] sm:$0xff]
        %v269 = vld [vmem:[%s168 + $0x1e8] sm:$0xff]
        %v270 = vld [vmem:[%s168 + $0x1f0] sm:$0xff]
        %v271 = vld [vmem:[%s168 + $0x1f8] sm:$0xff]
        %v272 = vld [vmem:[%s168 + $0x200] sm:$0xff]
        %v273 = vld [vmem:[%s168 + $0x208] sm:$0xff]
        %v274 = vld [vmem:[%s168 + $0x210] sm:$0xff]
        %v275 = vld [vmem:[%s168 + $0x218] sm:$0xff]
        %v276 = vld [vmem:[%s168 + $0x220] sm:$0xff]
        %v277 = vld [vmem:[%s168 + $0x228] sm:$0xff]
        %v278 = vld [vmem:[%s168 + $0x230] sm:$0xff]
        %v279 = vld [vmem:[%s168 + $0x238] sm:$0xff]
        %v280 = vld [vmem:[%s168 + $0x240] sm:$0xff]
        %v281 = vld [vmem:[%s168 + $0x248] sm:$0xff]
        %v282 = vld [vmem:[%s168 + $0x250] sm:$0xff]
        %v283 = vld [vmem:[%s168 + $0x258] sm:$0xff]
        %v284 = vld [vmem:[%s168 + $0x260] sm:$0xff]
        %v285 = vld [vmem:[%s168 + $0x268] sm:$0xff]
        %v286 = vld [vmem:[%s168 + $0x270] sm:$0xff]
        %v287 = vld [vmem:[%s168 + $0x278] sm:$0xff]
        %v288 = vld [vmem:[%s168 + $0x280] sm:$0xff]
        %v289 = vld [vmem:[%s168 + $0x288] sm:$0xff]
        %v290 = vld [vmem:[%s168 + $0x290] sm:$0xff]
        %v291 = vld [vmem:[%s168 + $0x298] sm:$0xff]
        %v292 = vld [vmem:[%s168 + $0x2a0] sm:$0xff]
        %v293 = vld [vmem:[%s168 + $0x2a8] sm:$0xff]
        %v294 = vld [vmem:[%s168 + $0x2b0] sm:$0xff]
        %v295 = vld [vmem:[%s168 + $0x2b8] sm:$0xff]
        %v296 = vld [vmem:[%s168 + $0x2c0] sm:$0xff]
        %v297 = vld [vmem:[%s168 + $0x2c8] sm:$0xff]
        %v298 = vld [vmem:[%s168 + $0x2d0] sm:$0xff]
        %v299 = vld [vmem:[%s168 + $0x2d8] sm:$0xff]
        %v300 = vld [vmem:[%s168 + $0x2e0] sm:$0xff]
        %v301 = vld [vmem:[%s168 + $0x2e8] sm:$0xff]
        %v302 = vld [vmem:[%s168 + $0x2f0] sm:$0xff]
        %v303 = vld [vmem:[%s168 + $0x2f8] sm:$0xff]
        %v304 = vld [vmem:[%s168 + $0x300] sm:$0xff]
        %v305 = vld [vmem:[%s168 + $0x308] sm:$0xff]
        %v306 = vld [vmem:[%s168 + $0x310] sm:$0xff]
        %v307 = vld [vmem:[%s168 + $0x318] sm:$0xff]
        %v308 = vld [vmem:[%s168 + $0x320] sm:$0xff]
        %v309 = vld [vmem:[%s168 + $0x328] sm:$0xff]
        %v310 = vld [vmem:[%s168 + $0x330] sm:$0xff]
        %v311 = vld [vmem:[%s168 + $0x338] sm:$0xff]
        %v312 = vld [vmem:[%s168 + $0x340] sm:$0xff]
        %v313 = vld [vmem:[%s168 + $0x348] sm:$0xff]
        %v314 = vld [vmem:[%s168 + $0x350] sm:$0xff]
        %v315 = vld [vmem:[%s168 + $0x358] sm:$0xff]
        %v316 = vld [vmem:[%s168 + $0x360] sm:$0xff]
        %v317 = vld [vmem:[%s168 + $0x368] sm:$0xff]
        %v318 = vld [vmem:[%s168 + $0x370] sm:$0xff]
        %v319 = vld [vmem:[%s168 + $0x378] sm:$0xff]
        %v320 = vld [vmem:[%s168 + $0x380] sm:$0xff]
        %v321 = vld [vmem:[%s168 + $0x388] sm:$0xff]
        %v322 = vld [vmem:[%s168 + $0x390] sm:$0xff]
        %v323 = vld [vmem:[%s168 + $0x398] sm:$0xff]
        %v324 = vld [vmem:[%s168 + $0x3a0] sm:$0xff]
        %v325 = vld [vmem:[%s168 + $0x3a8] sm:$0xff]
        %v326 = vld [vmem:[%s168 + $0x3b0] sm:$0xff]
        %v327 = vld [vmem:[%s168 + $0x3b8] sm:$0xff]
        %v328 = vld [vmem:[%s168 + $0x3c0] sm:$0xff]
        %v329 = vld [vmem:[%s168 + $0x3c8] sm:$0xff]
        %v330 = vld [vmem:[%s168 + $0x3d0] sm:$0xff]
        %v331 = vld [vmem:[%s168 + $0x3d8] sm:$0xff]
        %v332 = vld [vmem:[%s168 + $0x3e0] sm:$0xff]
        %v333 = vld [vmem:[%s168 + $0x3e8] sm:$0xff]
        %v334 = vld [vmem:[%s168 + $0x3f0] sm:$0xff]
        %v335 = vld [vmem:[%s168 + $0x3f8] sm:$0xff]
        %v336 = vld [vmem:[%s178] sm:$0x1]
        %v337 = vld [vmem:[%s178 + $0x1] sm:$0x1]
        %v338 = vld [vmem:[%s178 + $0x2] sm:$0x1]
        %v339 = vld [vmem:[%s178 + $0x3] sm:$0x1]
        %v340 = vld [vmem:[%s178 + $0x4] sm:$0x1]
        %v341 = vld [vmem:[%s178 + $0x5] sm:$0x1]
        %v342 = vld [vmem:[%s178 + $0x6] sm:$0x1]
        %v343 = vld [vmem:[%s178 + $0x7] sm:$0x1]
        %v344 = vld [vmem:[%s178 + $0x8] sm:$0x1]
        %v345 = vld [vmem:[%s178 + $0x9] sm:$0x1]
        %v346 = vld [vmem:[%s178 + $0xa] sm:$0x1]
        %v347 = vld [vmem:[%s178 + $0xb] sm:$0x1]
        %v348 = vld [vmem:[%s178 + $0xc] sm:$0x1]
        %v349 = vld [vmem:[%s178 + $0xd] sm:$0x1]
        %v350 = vld [vmem:[%s178 + $0xe] sm:$0x1]
        %v351 = vld [vmem:[%s178 + $0xf] sm:$0x1]
        %v352 = vld [vmem:[%s178 + $0x10] sm:$0x1]
        %v353 = vld [vmem:[%s178 + $0x11] sm:$0x1]
        %v354 = vld [vmem:[%s178 + $0x12] sm:$0x1]
        %v355 = vld [vmem:[%s178 + $0x13] sm:$0x1]
        %v356 = vld [vmem:[%s178 + $0x14] sm:$0x1]
        %v357 = vld [vmem:[%s178 + $0x15] sm:$0x1]
        %v358 = vld [vmem:[%s178 + $0x16] sm:$0x1]
        %v359 = vld [vmem:[%s178 + $0x17] sm:$0x1]
        %v360 = vld [vmem:[%s178 + $0x18] sm:$0x1]
        %v361 = vld [vmem:[%s178 + $0x19] sm:$0x1]
        %v362 = vld [vmem:[%s178 + $0x1a] sm:$0x1]
        %v363 = vld [vmem:[%s178 + $0x1b] sm:$0x1]
        %v364 = vld [vmem:[%s178 + $0x1c] sm:$0x1]
        %v365 = vld [vmem:[%s178 + $0x1d] sm:$0x1]
        %v366 = vld [vmem:[%s178 + $0x1e] sm:$0x1]
        %v367 = vld [vmem:[%s178 + $0x1f] sm:$0x1]
        %v368 = vld [vmem:[%s178 + $0x20] sm:$0x1]
        %v369 = vld [vmem:[%s178 + $0x21] sm:$0x1]
        %v370 = vld [vmem:[%s178 + $0x22] sm:$0x1]
        %v371 = vld [vmem:[%s178 + $0x23] sm:$0x1]
        %v372 = vld [vmem:[%s178 + $0x24] sm:$0x1]
        %v373 = vld [vmem:[%s178 + $0x25] sm:$0x1]
        %v374 = vld [vmem:[%s178 + $0x26] sm:$0x1]
        %v375 = vld [vmem:[%s178 + $0x27] sm:$0x1]
        %v376 = vld [vmem:[%s178 + $0x28] sm:$0x1]
        %v377 = vld [vmem:[%s178 + $0x29] sm:$0x1]
        %v378 = vld [vmem:[%s178 + $0x2a] sm:$0x1]
        %v379 = vld [vmem:[%s178 + $0x2b] sm:$0x1]
        %v380 = vld [vmem:[%s178 + $0x2c] sm:$0x1]
        %v381 = vld [vmem:[%s178 + $0x2d] sm:$0x1]
        %v382 = vld [vmem:[%s178 + $0x2e] sm:$0x1]
        %v383 = vld [vmem:[%s178 + $0x2f] sm:$0x1]
        %v384 = vld [vmem:[%s178 + $0x30] sm:$0x1]
        %v385 = vld [vmem:[%s178 + $0x31] sm:$0x1]
        %v386 = vld [vmem:[%s178 + $0x32] sm:$0x1]
        %v387 = vld [vmem:[%s178 + $0x33] sm:$0x1]
        %v388 = vld [vmem:[%s178 + $0x34] sm:$0x1]
        %v389 = vld [vmem:[%s178 + $0x35] sm:$0x1]
        %v390 = vld [vmem:[%s178 + $0x36] sm:$0x1]
        %v391 = vld [vmem:[%s178 + $0x37] sm:$0x1]
        %v392 = vld [vmem:[%s178 + $0x38] sm:$0x1]
        %v393 = vld [vmem:[%s178 + $0x39] sm:$0x1]
        %v394 = vld [vmem:[%s178 + $0x3a] sm:$0x1]
        %v395 = vld [vmem:[%s178 + $0x3b] sm:$0x1]
        %v396 = vld [vmem:[%s178 + $0x3c] sm:$0x1]
        %v397 = vld [vmem:[%s178 + $0x3d] sm:$0x1]
        %v398 = vld [vmem:[%s178 + $0x3e] sm:$0x1]
        %v399 = vld [vmem:[%s178 + $0x3f] sm:$0x1]
        %v400 = vld [vmem:[%s178 + $0x40] sm:$0x1]
        %v401 = vld [vmem:[%s178 + $0x41] sm:$0x1]
        %v402 = vld [vmem:[%s178 + $0x42] sm:$0x1]
        %v403 = vld [vmem:[%s178 + $0x43] sm:$0x1]
        %v404 = vld [vmem:[%s178 + $0x44] sm:$0x1]
        %v405 = vld [vmem:[%s178 + $0x45] sm:$0x1]
        %v406 = vld [vmem:[%s178 + $0x46] sm:$0x1]
        %v407 = vld [vmem:[%s178 + $0x47] sm:$0x1]
        %v408 = vld [vmem:[%s178 + $0x48] sm:$0x1]
        %v409 = vld [vmem:[%s178 + $0x49] sm:$0x1]
        %v410 = vld [vmem:[%s178 + $0x4a] sm:$0x1]
        %v411 = vld [vmem:[%s178 + $0x4b] sm:$0x1]
        %v412 = vld [vmem:[%s178 + $0x4c] sm:$0x1]
        %v413 = vld [vmem:[%s178 + $0x4d] sm:$0x1]
        %v414 = vld [vmem:[%s178 + $0x4e] sm:$0x1]
        %v415 = vld [vmem:[%s178 + $0x4f] sm:$0x1]
        %v416 = vld [vmem:[%s178 + $0x50] sm:$0x1]
        %v417 = vld [vmem:[%s178 + $0x51] sm:$0x1]
        %v418 = vld [vmem:[%s178 + $0x52] sm:$0x1]
        %v419 = vld [vmem:[%s178 + $0x53] sm:$0x1]
        %v420 = vld [vmem:[%s178 + $0x54] sm:$0x1]
        %v421 = vld [vmem:[%s178 + $0x55] sm:$0x1]
        %v422 = vld [vmem:[%s178 + $0x56] sm:$0x1]
        %v423 = vld [vmem:[%s178 + $0x57] sm:$0x1]
        %v424 = vld [vmem:[%s178 + $0x58] sm:$0x1]
        %v425 = vld [vmem:[%s178 + $0x59] sm:$0x1]
        %v426 = vld [vmem:[%s178 + $0x5a] sm:$0x1]
        %v427 = vld [vmem:[%s178 + $0x5b] sm:$0x1]
        %v428 = vld [vmem:[%s178 + $0x5c] sm:$0x1]
        %v429 = vld [vmem:[%s178 + $0x5d] sm:$0x1]
        %v430 = vld [vmem:[%s178 + $0x5e] sm:$0x1]
        %v431 = vld [vmem:[%s178 + $0x5f] sm:$0x1]
        %v432 = vld [vmem:[%s178 + $0x60] sm:$0x1]
        %v433 = vld [vmem:[%s178 + $0x61] sm:$0x1]
        %v434 = vld [vmem:[%s178 + $0x62] sm:$0x1]
        %v435 = vld [vmem:[%s178 + $0x63] sm:$0x1]
        %v436 = vld [vmem:[%s178 + $0x64] sm:$0x1]
        %v437 = vld [vmem:[%s178 + $0x65] sm:$0x1]
        %v438 = vld [vmem:[%s178 + $0x66] sm:$0x1]
        %v439 = vld [vmem:[%s178 + $0x67] sm:$0x1]
        %v440 = vld [vmem:[%s178 + $0x68] sm:$0x1]
        %v441 = vld [vmem:[%s178 + $0x69] sm:$0x1]
        %v442 = vld [vmem:[%s178 + $0x6a] sm:$0x1]
        %v443 = vld [vmem:[%s178 + $0x6b] sm:$0x1]
        %v444 = vld [vmem:[%s178 + $0x6c] sm:$0x1]
        %v445 = vld [vmem:[%s178 + $0x6d] sm:$0x1]
        %v446 = vld [vmem:[%s178 + $0x6e] sm:$0x1]
        %v447 = vld [vmem:[%s178 + $0x6f] sm:$0x1]
        %v448 = vld [vmem:[%s178 + $0x70] sm:$0x1]
        %v449 = vld [vmem:[%s178 + $0x71] sm:$0x1]
        %v450 = vld [vmem:[%s178 + $0x72] sm:$0x1]
        %v451 = vld [vmem:[%s178 + $0x73] sm:$0x1]
        %v452 = vld [vmem:[%s178 + $0x74] sm:$0x1]
        %v453 = vld [vmem:[%s178 + $0x75] sm:$0x1]
        %v454 = vld [vmem:[%s178 + $0x76] sm:$0x1]
        %v455 = vld [vmem:[%s178 + $0x77] sm:$0x1]
        %v456 = vld [vmem:[%s178 + $0x78] sm:$0x1]
        %v457 = vld [vmem:[%s178 + $0x79] sm:$0x1]
        %v458 = vld [vmem:[%s178 + $0x7a] sm:$0x1]
        %v459 = vld [vmem:[%s178 + $0x7b] sm:$0x1]
        %v460 = vld [vmem:[%s178 + $0x7c] sm:$0x1]
        %v461 = vld [vmem:[%s178 + $0x7d] sm:$0x1]
        %v462 = vld [vmem:[%s178 + $0x7e] sm:$0x1]
        %v463 = vld [vmem:[%s178 + $0x7f] sm:$0x1]
        %v592 = vperm.slane %v336, 0
        %v593 = vperm.slane %v337, 0
        %v594 = vperm.slane %v338, 0
        %v595 = vperm.slane %v339, 0
        %v596 = vperm.slane %v340, 0
        %v597 = vperm.slane %v341, 0
        %v598 = vperm.slane %v342, 0
        %v599 = vperm.slane %v343, 0
        %v600 = vperm.slane %v344, 0
        %v601 = vperm.slane %v345, 0
        %v602 = vperm.slane %v346, 0
        %v603 = vperm.slane %v347, 0
        %v604 = vperm.slane %v348, 0
        %v605 = vperm.slane %v349, 0
        %v606 = vperm.slane %v350, 0
        %v607 = vperm.slane %v351, 0
        %v608 = vperm.slane %v352, 0
        %v609 = vperm.slane %v353, 0
        %v610 = vperm.slane %v354, 0
        %v611 = vperm.slane %v355, 0
        %v612 = vperm.slane %v356, 0
        %v613 = vperm.slane %v357, 0
        %v614 = vperm.slane %v358, 0
        %v615 = vperm.slane %v359, 0
        %v616 = vperm.slane %v360, 0
        %v617 = vperm.slane %v361, 0
        %v618 = vperm.slane %v362, 0
        %v619 = vperm.slane %v363, 0
        %v620 = vperm.slane %v364, 0
        %v621 = vperm.slane %v365, 0
        %v622 = vperm.slane %v366, 0
        %v623 = vperm.slane %v367, 0
        %v624 = vperm.slane %v368, 0
        %v625 = vperm.slane %v369, 0
        %v626 = vperm.slane %v370, 0
        %v627 = vperm.slane %v371, 0
        %v628 = vperm.slane %v372, 0
        %v629 = vperm.slane %v373, 0
        %v630 = vperm.slane %v374, 0
        %v631 = vperm.slane %v375, 0
        %v632 = vperm.slane %v376, 0
        %v633 = vperm.slane %v377, 0
        %v634 = vperm.slane %v378, 0
        %v635 = vperm.slane %v379, 0
        %v636 = vperm.slane %v380, 0
        %v637 = vperm.slane %v381, 0
        %v638 = vperm.slane %v382, 0
        %v639 = vperm.slane %v383, 0
        %v640 = vperm.slane %v384, 0
        %v641 = vperm.slane %v385, 0
        %v642 = vperm.slane %v386, 0
        %v643 = vperm.slane %v387, 0
        %v644 = vperm.slane %v388, 0
        %v645 = vperm.slane %v389, 0
        %v646 = vperm.slane %v390, 0
        %v647 = vperm.slane %v391, 0
        %v648 = vperm.slane %v392, 0
        %v649 = vperm.slane %v393, 0
        %v650 = vperm.slane %v394, 0
        %v651 = vperm.slane %v395, 0
        %v652 = vperm.slane %v396, 0
        %v653 = vperm.slane %v397, 0
        %v654 = vperm.slane %v398, 0
        %v655 = vperm.slane %v399, 0
        %v656 = vperm.slane %v400, 0
        %v657 = vperm.slane %v401, 0
        %v658 = vperm.slane %v402, 0
        %v659 = vperm.slane %v403, 0
        %v660 = vperm.slane %v404, 0
        %v661 = vperm.slane %v405, 0
        %v662 = vperm.slane %v406, 0
        %v663 = vperm.slane %v407, 0
        %v664 = vperm.slane %v408, 0
        %v665 = vperm.slane %v409, 0
        %v666 = vperm.slane %v410, 0
        %v667 = vperm.slane %v411, 0
        %v668 = vperm.slane %v412, 0
        %v669 = vperm.slane %v413, 0
        %v670 = vperm.slane %v414, 0
        %v671 = vperm.slane %v415, 0
        %v672 = vperm.slane %v416, 0
        %v673 = vperm.slane %v417, 0
        %v674 = vperm.slane %v418, 0
        %v675 = vperm.slane %v419, 0
        %v676 = vperm.slane %v420, 0
        %v677 = vperm.slane %v421, 0
        %v678 = vperm.slane %v422, 0
        %v679 = vperm.slane %v423, 0
        %v680 = vperm.slane %v424, 0
        %v681 = vperm.slane %v425, 0
        %v682 = vperm.slane %v426, 0
        %v683 = vperm.slane %v427, 0
        %v684 = vperm.slane %v428, 0
        %v685 = vperm.slane %v429, 0
        %v686 = vperm.slane %v430, 0
        %v687 = vperm.slane %v431, 0
        %v688 = vperm.slane %v432, 0
        %v689 = vperm.slane %v433, 0
        %v690 = vperm.slane %v434, 0
        %v691 = vperm.slane %v435, 0
        %v692 = vperm.slane %v436, 0
        %v693 = vperm.slane %v437, 0
        %v694 = vperm.slane %v438, 0
        %v695 = vperm.slane %v439, 0
        %v696 = vperm.slane %v440, 0
        %v697 = vperm.slane %v441, 0
        %v698 = vperm.slane %v442, 0
        %v699 = vperm.slane %v443, 0
        %v700 = vperm.slane %v444, 0
        %v701 = vperm.slane %v445, 0
        %v702 = vperm.slane %v446, 0
        %v703 = vperm.slane %v447, 0
        %v704 = vperm.slane %v448, 0
        %v705 = vperm.slane %v449, 0
        %v706 = vperm.slane %v450, 0
        %v707 = vperm.slane %v451, 0
        %v708 = vperm.slane %v452, 0
        %v709 = vperm.slane %v453, 0
        %v710 = vperm.slane %v454, 0
        %v711 = vperm.slane %v455, 0
        %v712 = vperm.slane %v456, 0
        %v713 = vperm.slane %v457, 0
        %v714 = vperm.slane %v458, 0
        %v715 = vperm.slane %v459, 0
        %v716 = vperm.slane %v460, 0
        %v717 = vperm.slane %v461, 0
        %v718 = vperm.slane %v462, 0
        %v719 = vperm.slane %v463, 0
        %v848 = vadd.f32 %v208, %v592
        %v849 = vadd.f32 %v209, %v593
        %v850 = vadd.f32 %v210, %v594
        %v851 = vadd.f32 %v211, %v595
        %v852 = vadd.f32 %v212, %v596
        %v853 = vadd.f32 %v213, %v597
        %v854 = vadd.f32 %v214, %v598
        %v855 = vadd.f32 %v215, %v599
        %v856 = vadd.f32 %v216, %v600
        %v857 = vadd.f32 %v217, %v601
        %v858 = vadd.f32 %v218, %v602
        %v859 = vadd.f32 %v219, %v603
        %v860 = vadd.f32 %v220, %v604
        %v861 = vadd.f32 %v221, %v605
        %v862 = vadd.f32 %v222, %v606
        %v863 = vadd.f32 %v223, %v607
        %v864 = vadd.f32 %v224, %v608
        %v865 = vadd.f32 %v225, %v609
        %v866 = vadd.f32 %v226, %v610
        %v867 = vadd.f32 %v227, %v611
        %v868 = vadd.f32 %v228, %v612
        %v869 = vadd.f32 %v229, %v613
        %v870 = vadd.f32 %v230, %v614
        %v871 = vadd.f32 %v231, %v615
        %v872 = vadd.f32 %v232, %v616
        %v873 = vadd.f32 %v233, %v617
        %v874 = vadd.f32 %v234, %v618
        %v875 = vadd.f32 %v235, %v619
        %v876 = vadd.f32 %v236, %v620
        %v877 = vadd.f32 %v237, %v621
        %v878 = vadd.f32 %v238, %v622
        %v879 = vadd.f32 %v239, %v623
        %v880 = vadd.f32 %v240, %v624
        %v881 = vadd.f32 %v241, %v625
        %v882 = vadd.f32 %v242, %v626
        %v883 = vadd.f32 %v243, %v627
        %v884 = vadd.f32 %v244, %v628
        %v885 = vadd.f32 %v245, %v629
        %v886 = vadd.f32 %v246, %v630
        %v887 = vadd.f32 %v247, %v631
        %v888 = vadd.f32 %v248, %v632
        %v889 = vadd.f32 %v249, %v633
        %v890 = vadd.f32 %v250, %v634
        %v891 = vadd.f32 %v251, %v635
        %v892 = vadd.f32 %v252, %v636
        %v893 = vadd.f32 %v253, %v637
        %v894 = vadd.f32 %v254, %v638
        %v895 = vadd.f32 %v255, %v639
        %v896 = vadd.f32 %v256, %v640
        %v897 = vadd.f32 %v257, %v641
        %v898 = vadd.f32 %v258, %v642
        %v899 = vadd.f32 %v259, %v643
        %v900 = vadd.f32 %v260, %v644
        %v901 = vadd.f32 %v261, %v645
        %v902 = vadd.f32 %v262, %v646
        %v903 = vadd.f32 %v263, %v647
        %v904 = vadd.f32 %v264, %v648
        %v905 = vadd.f32 %v265, %v649
        %v906 = vadd.f32 %v266, %v650
        %v907 = vadd.f32 %v267, %v651
        %v908 = vadd.f32 %v268, %v652
        %v909 = vadd.f32 %v269, %v653
        %v910 = vadd.f32 %v270, %v654
        %v911 = vadd.f32 %v271, %v655
        %v912 = vadd.f32 %v272, %v656
        %v913 = vadd.f32 %v273, %v657
        %v914 = vadd.f32 %v274, %v658
        %v915 = vadd.f32 %v275, %v659
        %v916 = vadd.f32 %v276, %v660
        %v917 = vadd.f32 %v277, %v661
        %v918 = vadd.f32 %v278, %v662
        %v919 = vadd.f32 %v279, %v663
        %v920 = vadd.f32 %v280, %v664
        %v921 = vadd.f32 %v281, %v665
        %v922 = vadd.f32 %v282, %v666
        %v923 = vadd.f32 %v283, %v667
        %v924 = vadd.f32 %v284, %v668
        %v925 = vadd.f32 %v285, %v669
        %v926 = vadd.f32 %v286, %v670
        %v927 = vadd.f32 %v287, %v671
        %v928 = vadd.f32 %v288, %v672
        %v929 = vadd.f32 %v289, %v673
        %v930 = vadd.f32 %v290, %v674
        %v931 = vadd.f32 %v291, %v675
        %v932 = vadd.f32 %v292, %v676
        %v933 = vadd.f32 %v293, %v677
        %v934 = vadd.f32 %v294, %v678
        %v935 = vadd.f32 %v295, %v679
        %v936 = vadd.f32 %v296, %v680
        %v937 = vadd.f32 %v297, %v681
        %v938 = vadd.f32 %v298, %v682
        %v939 = vadd.f32 %v299, %v683
        %v940 = vadd.f32 %v300, %v684
        %v941 = vadd.f32 %v301, %v685
        %v942 = vadd.f32 %v302, %v686
        %v943 = vadd.f32 %v303, %v687
        %v944 = vadd.f32 %v304, %v688
        %v945 = vadd.f32 %v305, %v689
        %v946 = vadd.f32 %v306, %v690
        %v947 = vadd.f32 %v307, %v691
        %v948 = vadd.f32 %v308, %v692
        %v949 = vadd.f32 %v309, %v693
        %v950 = vadd.f32 %v310, %v694
        %v951 = vadd.f32 %v311, %v695
        %v952 = vadd.f32 %v312, %v696
        %v953 = vadd.f32 %v313, %v697
        %v954 = vadd.f32 %v314, %v698
        %v955 = vadd.f32 %v315, %v699
        %v956 = vadd.f32 %v316, %v700
        %v957 = vadd.f32 %v317, %v701
        %v958 = vadd.f32 %v318, %v702
        %v959 = vadd.f32 %v319, %v703
        %v960 = vadd.f32 %v320, %v704
        %v961 = vadd.f32 %v321, %v705
        %v962 = vadd.f32 %v322, %v706
        %v963 = vadd.f32 %v323, %v707
        %v964 = vadd.f32 %v324, %v708
        %v965 = vadd.f32 %v325, %v709
        %v966 = vadd.f32 %v326, %v710
        %v967 = vadd.f32 %v327, %v711
        %v968 = vadd.f32 %v328, %v712
        %v969 = vadd.f32 %v329, %v713
        %v970 = vadd.f32 %v330, %v714
        %v971 = vadd.f32 %v331, %v715
        %v972 = vadd.f32 %v332, %v716
        %v973 = vadd.f32 %v333, %v717
        %v974 = vadd.f32 %v334, %v718
        %v975 = vadd.f32 %v335, %v719
        %976 = vst [vmem:[%s204] sm:$0xff] %v848
        %977 = vst [vmem:[%s204 + $0x8] sm:$0xff] %v849
        %978 = vst [vmem:[%s204 + $0x10] sm:$0xff] %v850
        %979 = vst [vmem:[%s204 + $0x18] sm:$0xff] %v851
        %980 = vst [vmem:[%s204 + $0x20] sm:$0xff] %v852
        %981 = vst [vmem:[%s204 + $0x28] sm:$0xff] %v853
        %982 = vst [vmem:[%s204 + $0x30] sm:$0xff] %v854
        %983 = vst [vmem:[%s204 + $0x38] sm:$0xff] %v855
        %984 = vst [vmem:[%s204 + $0x40] sm:$0xff] %v856
        %985 = vst [vmem:[%s204 + $0x48] sm:$0xff] %v857
        %986 = vst [vmem:[%s204 + $0x50] sm:$0xff] %v858
        %987 = vst [vmem:[%s204 + $0x58] sm:$0xff] %v859
        %988 = vst [vmem:[%s204 + $0x60] sm:$0xff] %v860
        %989 = vst [vmem:[%s204 + $0x68] sm:$0xff] %v861
        %990 = vst [vmem:[%s204 + $0x70] sm:$0xff] %v862
        %991 = vst [vmem:[%s204 + $0x78] sm:$0xff] %v863
        %992 = vst [vmem:[%s204 + $0x80] sm:$0xff] %v864
        %993 = vst [vmem:[%s204 + $0x88] sm:$0xff] %v865
        %994 = vst [vmem:[%s204 + $0x90] sm:$0xff] %v866
        %995 = vst [vmem:[%s204 + $0x98] sm:$0xff] %v867
        %996 = vst [vmem:[%s204 + $0xa0] sm:$0xff] %v868
        %997 = vst [vmem:[%s204 + $0xa8] sm:$0xff] %v869
        %998 = vst [vmem:[%s204 + $0xb0] sm:$0xff] %v870
        %999 = vst [vmem:[%s204 + $0xb8] sm:$0xff] %v871
        %1000 = vst [vmem:[%s204 + $0xc0] sm:$0xff] %v872
        %1001 = vst [vmem:[%s204 + $0xc8] sm:$0xff] %v873
        %1002 = vst [vmem:[%s204 + $0xd0] sm:$0xff] %v874
        %1003 = vst [vmem:[%s204 + $0xd8] sm:$0xff] %v875
        %1004 = vst [vmem:[%s204 + $0xe0] sm:$0xff] %v876
        %1005 = vst [vmem:[%s204 + $0xe8] sm:$0xff] %v877
        %1006 = vst [vmem:[%s204 + $0xf0] sm:$0xff] %v878
        %1007 = vst [vmem:[%s204 + $0xf8] sm:$0xff] %v879
        %1008 = vst [vmem:[%s204 + $0x100] sm:$0xff] %v880
        %1009 = vst [vmem:[%s204 + $0x108] sm:$0xff] %v881
        %1010 = vst [vmem:[%s204 + $0x110] sm:$0xff] %v882
        %1011 = vst [vmem:[%s204 + $0x118] sm:$0xff] %v883
        %1012 = vst [vmem:[%s204 + $0x120] sm:$0xff] %v884
        %1013 = vst [vmem:[%s204 + $0x128] sm:$0xff] %v885
        %1014 = vst [vmem:[%s204 + $0x130] sm:$0xff] %v886
        %1015 = vst [vmem:[%s204 + $0x138] sm:$0xff] %v887
        %1016 = vst [vmem:[%s204 + $0x140] sm:$0xff] %v888
        %1017 = vst [vmem:[%s204 + $0x148] sm:$0xff] %v889
        %1018 = vst [vmem:[%s204 + $0x150] sm:$0xff] %v890
        %1019 = vst [vmem:[%s204 + $0x158] sm:$0xff] %v891
        %1020 = vst [vmem:[%s204 + $0x160] sm:$0xff] %v892
        %1021 = vst [vmem:[%s204 + $0x168] sm:$0xff] %v893
        %1022 = vst [vmem:[%s204 + $0x170] sm:$0xff] %v894
        %1023 = vst [vmem:[%s204 + $0x178] sm:$0xff] %v895
        %1024 = vst [vmem:[%s204 + $0x180] sm:$0xff] %v896
        %1025 = vst [vmem:[%s204 + $0x188] sm:$0xff] %v897
        %1026 = vst [vmem:[%s204 + $0x190] sm:$0xff] %v898
        %1027 = vst [vmem:[%s204 + $0x198] sm:$0xff] %v899
        %1028 = vst [vmem:[%s204 + $0x1a0] sm:$0xff] %v900
        %1029 = vst [vmem:[%s204 + $0x1a8] sm:$0xff] %v901
        %1030 = vst [vmem:[%s204 + $0x1b0] sm:$0xff] %v902
        %1031 = vst [vmem:[%s204 + $0x1b8] sm:$0xff] %v903
        %1032 = vst [vmem:[%s204 + $0x1c0] sm:$0xff] %v904
        %1033 = vst [vmem:[%s204 + $0x1c8] sm:$0xff] %v905
        %1034 = vst [vmem:[%s204 + $0x1d0] sm:$0xff] %v906
        %1035 = vst [vmem:[%s204 + $0x1d8] sm:$0xff] %v907
        %1036 = vst [vmem:[%s204 + $0x1e0] sm:$0xff] %v908
        %1037 = vst [vmem:[%s204 + $0x1e8] sm:$0xff] %v909
        %1038 = vst [vmem:[%s204 + $0x1f0] sm:$0xff] %v910
        %1039 = vst [vmem:[%s204 + $0x1f8] sm:$0xff] %v911
        %1040 = vst [vmem:[%s204 + $0x200] sm:$0xff] %v912
        %1041 = vst [vmem:[%s204 + $0x208] sm:$0xff] %v913
        %1042 = vst [vmem:[%s204 + $0x210] sm:$0xff] %v914
        %1043 = vst [vmem:[%s204 + $0x218] sm:$0xff] %v915
        %1044 = vst [vmem:[%s204 + $0x220] sm:$0xff] %v916
        %1045 = vst [vmem:[%s204 + $0x228] sm:$0xff] %v917
        %1046 = vst [vmem:[%s204 + $0x230] sm:$0xff] %v918
        %1047 = vst [vmem:[%s204 + $0x238] sm:$0xff] %v919
        %1048 = vst [vmem:[%s204 + $0x240] sm:$0xff] %v920
        %1049 = vst [vmem:[%s204 + $0x248] sm:$0xff] %v921
        %1050 = vst [vmem:[%s204 + $0x250] sm:$0xff] %v922
        %1051 = vst [vmem:[%s204 + $0x258] sm:$0xff] %v923
        %1052 = vst [vmem:[%s204 + $0x260] sm:$0xff] %v924
        %1053 = vst [vmem:[%s204 + $0x268] sm:$0xff] %v925
        %1054 = vst [vmem:[%s204 + $0x270] sm:$0xff] %v926
        %1055 = vst [vmem:[%s204 + $0x278] sm:$0xff] %v927
        %1056 = vst [vmem:[%s204 + $0x280] sm:$0xff] %v928
        %1057 = vst [vmem:[%s204 + $0x288] sm:$0xff] %v929
        %1058 = vst [vmem:[%s204 + $0x290] sm:$0xff] %v930
        %1059 = vst [vmem:[%s204 + $0x298] sm:$0xff] %v931
        %1060 = vst [vmem:[%s204 + $0x2a0] sm:$0xff] %v932
        %1061 = vst [vmem:[%s204 + $0x2a8] sm:$0xff] %v933
        %1062 = vst [vmem:[%s204 + $0x2b0] sm:$0xff] %v934
        %1063 = vst [vmem:[%s204 + $0x2b8] sm:$0xff] %v935
        %1064 = vst [vmem:[%s204 + $0x2c0] sm:$0xff] %v936
        %1065 = vst [vmem:[%s204 + $0x2c8] sm:$0xff] %v937
        %1066 = vst [vmem:[%s204 + $0x2d0] sm:$0xff] %v938
        %1067 = vst [vmem:[%s204 + $0x2d8] sm:$0xff] %v939
        %1068 = vst [vmem:[%s204 + $0x2e0] sm:$0xff] %v940
        %1069 = vst [vmem:[%s204 + $0x2e8] sm:$0xff] %v941
        %1070 = vst [vmem:[%s204 + $0x2f0] sm:$0xff] %v942
        %1071 = vst [vmem:[%s204 + $0x2f8] sm:$0xff] %v943
        %1072 = vst [vmem:[%s204 + $0x300] sm:$0xff] %v944
        %1073 = vst [vmem:[%s204 + $0x308] sm:$0xff] %v945
        %1074 = vst [vmem:[%s204 + $0x310] sm:$0xff] %v946
        %1075 = vst [vmem:[%s204 + $0x318] sm:$0xff] %v947
        %1076 = vst [vmem:[%s204 + $0x320] sm:$0xff] %v948
        %1077 = vst [vmem:[%s204 + $0x328] sm:$0xff] %v949
        %1078 = vst [vmem:[%s204 + $0x330] sm:$0xff] %v950
        %1079 = vst [vmem:[%s204 + $0x338] sm:$0xff] %v951
        %1080 = vst [vmem:[%s204 + $0x340] sm:$0xff] %v952
        %1081 = vst [vmem:[%s204 + $0x348] sm:$0xff] %v953
        %1082 = vst [vmem:[%s204 + $0x350] sm:$0xff] %v954
        %1083 = vst [vmem:[%s204 + $0x358] sm:$0xff] %v955
        %1084 = vst [vmem:[%s204 + $0x360] sm:$0xff] %v956
        %1085 = vst [vmem:[%s204 + $0x368] sm:$0xff] %v957
        %1086 = vst [vmem:[%s204 + $0x370] sm:$0xff] %v958
        %1087 = vst [vmem:[%s204 + $0x378] sm:$0xff] %v959
        %1088 = vst [vmem:[%s204 + $0x380] sm:$0xff] %v960
        %1089 = vst [vmem:[%s204 + $0x388] sm:$0xff] %v961
        %1090 = vst [vmem:[%s204 + $0x390] sm:$0xff] %v962
        %1091 = vst [vmem:[%s204 + $0x398] sm:$0xff] %v963
        %1092 = vst [vmem:[%s204 + $0x3a0] sm:$0xff] %v964
        %1093 = vst [vmem:[%s204 + $0x3a8] sm:$0xff] %v965
        %1094 = vst [vmem:[%s204 + $0x3b0] sm:$0xff] %v966
        %1095 = vst [vmem:[%s204 + $0x3b8] sm:$0xff] %v967
        %1096 = vst [vmem:[%s204 + $0x3c0] sm:$0xff] %v968
        %1097 = vst [vmem:[%s204 + $0x3c8] sm:$0xff] %v969
        %1098 = vst [vmem:[%s204 + $0x3d0] sm:$0xff] %v970
        %1099 = vst [vmem:[%s204 + $0x3d8] sm:$0xff] %v971
        %1100 = vst [vmem:[%s204 + $0x3e0] sm:$0xff] %v972
        %1101 = vst [vmem:[%s204 + $0x3e8] sm:$0xff] %v973
        %1102 = vst [vmem:[%s204 + $0x3f0] sm:$0xff] %v974
        %1103 = vst [vmem:[%s204 + $0x3f8] sm:$0xff] %v975
        %s1104 = sand.u32 %s82, 1
        %s1105 = scalar_lea.sflag [#allocation4], %s1104
        %s1106 = sand.u32 %s82, 1
        %s1107 = smul.addr %s1106, 1024
        %s1108 = scalar_lea.vmem [#allocation7], %s1107
        // Predicated region
        $region37: #{tpu_custom_call.1} parent=27 // pred_check
          %p1109 = pneg %p92
        $region38: #{tpu_custom_call.1} parent=27 // pred_check_branch
          %1111 = sbr.rel (%p1109) target = $region40
        $region39: #{tpu_custom_call.1} parent=27 // pred_region
          %s1112 = smul.u32 128, %s22
          %1114 = vsyncadd %s1105, 0
          %s1115 = smul.addr %s1112, 8
          %s1116 = scalar_lea.hbm %s2, %s1115
          %s1117 = sshll.u32 %s1108, 4
          %s1118 = int_to_ptr.vmem [resolvable:$true] %s1117
          %s1119 = sshll.u32 %s1116, 4
          %s1120 = int_to_ptr.hbm [resolvable:$true] %s1119
          %1125 = dma.vmem_to_hbm [thread:$0]  %s1118, 16384, %s1120, %s1105, 128, 128, 8
        $region40: #{tpu_custom_call.1} parent=27 // pred_fallthru
          _
      $region28: #{tpu_custom_call.1} parent=5 // pred_fallthru
        _
      %p1126 = scmp.le.s32.totalorder 2, %s17
      // Predicated region
      $region41: #{tpu_custom_call.1} parent=5 // pred_check
        %p1127 = pneg %p1126
      $region42: #{tpu_custom_call.1} parent=5 // pred_check_branch
        %1129 = sbr.rel (%p1127) target = $region44
      $region43: #{tpu_custom_call.1} parent=5 // pred_region
        %s1130 = ssub.s32 %s17, 2
        // Predicated region
        $region45: #{tpu_custom_call.1} parent=43 // pred_check
          %p1131 = pneg %p98
        $region46: #{tpu_custom_call.1} parent=43 // pred_check_branch
          %1133 = sbr.rel (%p1131) target = $region48
        $region47: #{tpu_custom_call.1} parent=43 // pred_region
          %s1134 = sand.u32 %s83, 1
          %s1135 = scalar_lea.sflag [#allocation4], %s1134
          %s1136 = sand.u32 %s83, 1
          %s1137 = smul.addr %s1136, 1024
          %s1138 = scalar_lea.vmem [#allocation7], %s1137
          %1140 = dma.done %s1135, 16384
        $region48: #{tpu_custom_call.1} parent=43 // pred_fallthru
          _
      $region44: #{tpu_custom_call.1} parent=5 // pred_fallthru
        _
    $region6: #{tpu_custom_call.1} parent=1 // loop_footer
      %s21 = sadd.s32 1, %s17
    $region7: #{tpu_custom_call.1} parent=1 // loop_footer_branch
      %16 = sbr.rel target = $region3
    $region8: #{tpu_custom_call.1} parent=1 // loop_exit
      _
    %1141 = vsyncpa [#allocation3], 1
    %s1142 = scalar_lea.sflag [#allocation3], 1
    %1143 = vsyncpa %s1142, 1
    %1144 = vsyncpa [#allocation6], 1
    %s1145 = scalar_lea.sflag [#allocation6], 1
    %1146 = vsyncpa %s1145, 1
    %1147 = vsyncpa [#allocation4], 1
    %s1148 = scalar_lea.sflag [#allocation4], 1
    %1149 = vsyncpa %s1148, 1

</llo_original>
